<compile_context>
chip_gen: v5e
topology: v5e:2x2
jax: 0.10.0
libtpu: 0.0.40
codegen_flags: <defaults>
</compile_context>

<pallas_src>
import jax
import jax.numpy as jnp
from jax.experimental import pallas as pl
from jax.experimental.pallas import tpu as pltpu

_OUT_LANES = 128  # lane-dense padded width of the final layer


def _round_up(x, m):
    return ((x + m - 1) // m) * m


def _fmodel_kernel(s_ref, a_ref,
                   w1s_ref, w1a_ref, b1_ref,
                   w2_ref, b2_ref,
                   w3_ref, b3_ref,
                   w4_ref, b4_ref,
                   o_ref):
    """Whole 4-layer MLP for one batch tile. MXU matmuls in bf16 with f32
    accumulation; bias/ReLU in f32 (v5e has no bf16 VPU path)."""
    bf16 = jnp.bfloat16

    # Layer 1: fused concat -> split-K matmul (state @ w1[:S] + action @ w1[S:]).
    h = (jnp.dot(s_ref[...].astype(bf16), w1s_ref[...],
                 preferred_element_type=jnp.float32)
         + jnp.dot(a_ref[...].astype(bf16), w1a_ref[...],
                   preferred_element_type=jnp.float32)
         + b1_ref[...])
    h = jnp.maximum(h, 0.0)

    # Layer 2.
    h = jnp.dot(h.astype(bf16), w2_ref[...],
                preferred_element_type=jnp.float32) + b2_ref[...]
    h = jnp.maximum(h, 0.0)

    # Layer 3.
    h = jnp.dot(h.astype(bf16), w3_ref[...],
                preferred_element_type=jnp.float32) + b3_ref[...]
    h = jnp.maximum(h, 0.0)

    # Layer 4: lane-dense (padded to 128 lanes) unmasked store.
    o_ref[...] = (jnp.dot(h.astype(bf16), w4_ref[...],
                          preferred_element_type=jnp.float32)
                  + b4_ref[...]).astype(o_ref.dtype)


def fmodel_forward(state, action, params, *, batch_tile=512):
    """JAX wrapper: param prep (bf16 cast, w1 split, w4 lane-padding), batch
    padding to a tile multiple, and the pallas_call over batch tiles."""
    B, S = state.shape
    A = action.shape[1]
    out_dim = params["w4"].shape[1]  # == state_dim

    # Pick a batch tile: multiple of 8 sublanes, no bigger than the (rounded)
    # batch. Default 512 rows keeps per-step overhead negligible while fitting
    # comfortably in v7x's 64 MiB VMEM (per-step buffers are << 1 MiB).
    batch_tile = max(8, min(batch_tile, _round_up(B, 8)))
    batch_tile = _round_up(batch_tile, 8)
    padded_B = _round_up(B, batch_tile)
    if padded_B != B:
        pad = padded_B - B
        state = jnp.pad(state, ((0, pad), (0, 0)))
        action = jnp.pad(action, ((0, pad), (0, 0)))

    bf16 = jnp.bfloat16
    # Weights -> bf16 (MXU-native); first-layer weight split to fuse the concat.
    w1 = params["w1"].astype(bf16)
    w1_s, w1_a = w1[:S], w1[S:]
    w2 = params["w2"].astype(bf16)
    w3 = params["w3"].astype(bf16)
    # Last layer zero-padded to 128 output lanes for an unmasked, lane-dense store.
    w4 = jnp.zeros((params["w4"].shape[0], _OUT_LANES), bf16)
    w4 = w4.at[:, :out_dim].set(params["w4"].astype(bf16))
    # Biases stay f32, shape (1, out) so they sit on the lane axis.
    b1 = params["b1"].astype(jnp.float32)
    b2 = params["b2"].astype(jnp.float32)
    b3 = params["b3"].astype(jnp.float32)
    b4 = jnp.zeros((1, _OUT_LANES), jnp.float32)
    b4 = b4.at[:, :out_dim].set(params["b4"].astype(jnp.float32))

    full = lambda arr: pl.BlockSpec(arr.shape, lambda i: (0, 0))

    out_padded = pl.pallas_call(
        _fmodel_kernel,
        out_shape=jax.ShapeDtypeStruct((padded_B, _OUT_LANES), jnp.float32),
        grid_spec=pltpu.PrefetchScalarGridSpec(
            num_scalar_prefetch=0,
            grid=(padded_B // batch_tile,),
            in_specs=[
                pl.BlockSpec((batch_tile, S), lambda i: (i, 0)),   # state tile
                pl.BlockSpec((batch_tile, A), lambda i: (i, 0)),   # action tile
                full(w1_s), full(w1_a), full(b1),
                full(w2), full(b2),
                full(w3), full(b3),
                full(w4), full(b4),
            ],
            out_specs=pl.BlockSpec((batch_tile, _OUT_LANES), lambda i: (i, 0)),
        ),
        compiler_params=pltpu.CompilerParams(
            dimension_semantics=("parallel",)),  # shards across v7x's 2 TCs
    )(state, action, w1_s, w1_a, b1, w2, b2, w3, b3, w4, b4)

    # Strip batch padding and the lane padding of the final layer.
    return out_padded[:B, :out_dim]


def init_params(key, state_dim, action_dim):
    """Deterministic synthetic weights, shapes as in Fmodel.__init__."""
    dims = [(state_dim + action_dim, 64), (64, 128), (128, 32), (32, state_dim)]
    params = {}
    for idx, (d_in, d_out) in enumerate(dims, start=1):
        key, kw, kb = jax.random.split(key, 3)
        bound = 1.0 / jnp.sqrt(jnp.float32(d_in))
        params[f"w{idx}"] = jax.random.uniform(
            kw, (d_in, d_out), jnp.float32, -bound, bound)
        params[f"b{idx}"] = jax.random.uniform(
            kb, (1, d_out), jnp.float32, -bound, bound)
    return params


def _reference_forward_f32(state, action, params):
    """Exact f32 reference (matches the PyTorch module's math)."""
    x = jnp.concatenate([state, action], axis=1)
    h = jnp.maximum(x @ params["w1"] + params["b1"], 0.0)
    h = jnp.maximum(h @ params["w2"] + params["b2"], 0.0)
    h = jnp.maximum(h @ params["w3"] + params["b3"], 0.0)
    return h @ params["w4"] + params["b4"]


def _reference_forward_bf16(state, action, params):
    """Reference that mirrors the kernel's bf16-in / f32-accumulate math."""
    S = state.shape[1]
    bf16 = jnp.bfloat16
    w1 = params["w1"].astype(bf16)
    h = (jnp.dot(state.astype(bf16), w1[:S], preferred_element_type=jnp.float32)
         + jnp.dot(action.astype(bf16), w1[S:], preferred_element_type=jnp.float32)
         + params["b1"])
    h = jnp.maximum(h, 0.0)
    h = jnp.dot(h.astype(bf16), params["w2"].astype(bf16),
                preferred_element_type=jnp.float32) + params["b2"]
    h = jnp.maximum(h, 0.0)
    h = jnp.dot(h.astype(bf16), params["w3"].astype(bf16),
                preferred_element_type=jnp.float32) + params["b3"]
    h = jnp.maximum(h, 0.0)
    return jnp.dot(h.astype(bf16), params["w4"].astype(bf16),
                   preferred_element_type=jnp.float32) + params["b4"]


if __name__ == "__main__":
    STATE_DIM = 8
    ACTION_DIM = 4
    BATCH = 50  # deliberately NOT a multiple of the tile -> exercises padding

    key = jax.random.PRNGKey(0)
    key, ks, ka, kp = jax.random.split(key, 4)
    state = jax.random.normal(ks, (BATCH, STATE_DIM), jnp.float32)
    action = jax.random.normal(ka, (BATCH, ACTION_DIM), jnp.float32)
    params = init_params(kp, STATE_DIM, ACTION_DIM)

    # Small tile so the test also exercises a multi-step, pipelined grid.
    out = fmodel_forward(state, action, params, batch_tile=16)
    out = jax.block_until_ready(out)
    assert out.shape == (BATCH, STATE_DIM)

    # Tight check against a reference that replicates the kernel's bf16 math.
    ref_bf16 = _reference_forward_bf16(state, action, params)
    assert jnp.allclose(out, ref_bf16, atol=2e-3, rtol=2e-3)

    # Relaxed check against the exact f32 module math (bf16 MXU-input tradeoff).
    ref_f32 = _reference_forward_f32(state, action, params)
    assert jnp.allclose(out, ref_f32, atol=5e-2, rtol=5e-2)

    print("KERNEL_OK")
</pallas_src>

<mosaic_0001>
module attributes {stable_mosaic.version = 11 : i64} {
  func.func @_fmodel_kernel(%arg0: i32, %arg1: memref<16x8xf32, #tpu.memory_space<vmem>>, %arg2: memref<16x4xf32, #tpu.memory_space<vmem>>, %arg3: memref<8x64xbf16, #tpu.memory_space<vmem>>, %arg4: memref<4x64xbf16, #tpu.memory_space<vmem>>, %arg5: memref<1x64xf32, #tpu.memory_space<vmem>>, %arg6: memref<64x128xbf16, #tpu.memory_space<vmem>>, %arg7: memref<1x128xf32, #tpu.memory_space<vmem>>, %arg8: memref<128x32xbf16, #tpu.memory_space<vmem>>, %arg9: memref<1x32xf32, #tpu.memory_space<vmem>>, %arg10: memref<32x128xbf16, #tpu.memory_space<vmem>>, %arg11: memref<1x128xf32, #tpu.memory_space<vmem>>, %arg12: memref<16x128xf32, #tpu.memory_space<vmem>>) attributes {dimension_semantics = [#tpu.dimension_semantics<parallel>], iteration_bounds = array<i64: 4>, scalar_prefetch = 0 : i64, scratch_operands = 0 : i64, tpu.core_type = #tpu.core_type<tc>, window_params = [{transform_indices = @transform_0, window_bounds = array<i64: 16, 8>}, {transform_indices = @transform_1, window_bounds = array<i64: 16, 4>}, {pipeline_mode = #tpu.pipeline_mode<synchronous>, transform_indices = @transform_2, window_bounds = array<i64: 8, 64>}, {pipeline_mode = #tpu.pipeline_mode<synchronous>, transform_indices = @transform_3, window_bounds = array<i64: 4, 64>}, {pipeline_mode = #tpu.pipeline_mode<synchronous>, transform_indices = @transform_4, window_bounds = array<i64: 1, 64>}, {pipeline_mode = #tpu.pipeline_mode<synchronous>, transform_indices = @transform_5, window_bounds = array<i64: 64, 128>}, {pipeline_mode = #tpu.pipeline_mode<synchronous>, transform_indices = @transform_6, window_bounds = array<i64: 1, 128>}, {pipeline_mode = #tpu.pipeline_mode<synchronous>, transform_indices = @transform_7, window_bounds = array<i64: 128, 32>}, {pipeline_mode = #tpu.pipeline_mode<synchronous>, transform_indices = @transform_8, window_bounds = array<i64: 1, 32>}, {pipeline_mode = #tpu.pipeline_mode<synchronous>, transform_indices = @transform_9, window_bounds = array<i64: 32, 128>}, {pipeline_mode = #tpu.pipeline_mode<synchronous>, transform_indices = @transform_10, window_bounds = array<i64: 1, 128>}, {transform_indices = @transform_11, window_bounds = array<i64: 16, 128>}]} {
    %c0 = arith.constant 0 : index
    %c0_0 = arith.constant 0 : index
    %0 = vector.load %arg1[%c0, %c0_0] : memref<16x8xf32, #tpu.memory_space<vmem>>, vector<16x8xf32>
    %1 = arith.truncf %0 : vector<16x8xf32> to vector<16x8xbf16>
    %c0_1 = arith.constant 0 : index
    %c0_2 = arith.constant 0 : index
    %2 = vector.load %arg3[%c0_1, %c0_2] : memref<8x64xbf16, #tpu.memory_space<vmem>>, vector<8x64xbf16>
    %cst = arith.constant dense<0.000000e+00> : vector<16x64xf32>
    %3 = tpu.matmul %1, %2, %cst {dimension_numbers = #tpu.dot_dimension_numbers<[1], [0], [0], [1], [0, 0, 1, 1], [], []>} : vector<16x8xbf16>, vector<8x64xbf16>, vector<16x64xf32> -> vector<16x64xf32>
    %c0_3 = arith.constant 0 : index
    %c0_4 = arith.constant 0 : index
    %4 = vector.load %arg2[%c0_3, %c0_4] : memref<16x4xf32, #tpu.memory_space<vmem>>, vector<16x4xf32>
    %5 = arith.truncf %4 : vector<16x4xf32> to vector<16x4xbf16>
    %c0_5 = arith.constant 0 : index
    %c0_6 = arith.constant 0 : index
    %6 = vector.load %arg4[%c0_5, %c0_6] : memref<4x64xbf16, #tpu.memory_space<vmem>>, vector<4x64xbf16>
    %cst_7 = arith.constant dense<0.000000e+00> : vector<16x64xf32>
    %7 = tpu.matmul %5, %6, %cst_7 {dimension_numbers = #tpu.dot_dimension_numbers<[1], [0], [0], [1], [0, 0, 1, 1], [], []>} : vector<16x4xbf16>, vector<4x64xbf16>, vector<16x64xf32> -> vector<16x64xf32>
    %8 = arith.addf %3, %7 : vector<16x64xf32>
    %c0_8 = arith.constant 0 : index
    %c0_9 = arith.constant 0 : index
    %9 = vector.load %arg5[%c0_8, %c0_9] : memref<1x64xf32, #tpu.memory_space<vmem>>, vector<1x64xf32>
    %10 = vector.broadcast %9 : vector<1x64xf32> to vector<16x64xf32>
    %11 = arith.addf %8, %10 : vector<16x64xf32>
    %cst_10 = arith.constant 0.000000e+00 : f32
    %12 = vector.broadcast %cst_10 : f32 to vector<16x64xf32>
    %13 = arith.maximumf %11, %12 : vector<16x64xf32>
    %14 = arith.truncf %13 : vector<16x64xf32> to vector<16x64xbf16>
    %c0_11 = arith.constant 0 : index
    %c0_12 = arith.constant 0 : index
    %15 = vector.load %arg6[%c0_11, %c0_12] : memref<64x128xbf16, #tpu.memory_space<vmem>>, vector<64x128xbf16>
    %cst_13 = arith.constant dense<0.000000e+00> : vector<16x128xf32>
    %16 = tpu.matmul %14, %15, %cst_13 {dimension_numbers = #tpu.dot_dimension_numbers<[1], [0], [0], [1], [0, 0, 1, 1], [], []>} : vector<16x64xbf16>, vector<64x128xbf16>, vector<16x128xf32> -> vector<16x128xf32>
    %c0_14 = arith.constant 0 : index
    %c0_15 = arith.constant 0 : index
    %17 = vector.load %arg7[%c0_14, %c0_15] : memref<1x128xf32, #tpu.memory_space<vmem>>, vector<1x128xf32>
    %18 = vector.broadcast %17 : vector<1x128xf32> to vector<16x128xf32>
    %19 = arith.addf %16, %18 : vector<16x128xf32>
    %cst_16 = arith.constant 0.000000e+00 : f32
    %20 = vector.broadcast %cst_16 : f32 to vector<16x128xf32>
    %21 = arith.maximumf %19, %20 : vector<16x128xf32>
    %22 = arith.truncf %21 : vector<16x128xf32> to vector<16x128xbf16>
    %c0_17 = arith.constant 0 : index
    %c0_18 = arith.constant 0 : index
    %23 = vector.load %arg8[%c0_17, %c0_18] : memref<128x32xbf16, #tpu.memory_space<vmem>>, vector<128x32xbf16>
    %cst_19 = arith.constant dense<0.000000e+00> : vector<16x32xf32>
    %24 = tpu.matmul %22, %23, %cst_19 {dimension_numbers = #tpu.dot_dimension_numbers<[1], [0], [0], [1], [0, 0, 1, 1], [], []>} : vector<16x128xbf16>, vector<128x32xbf16>, vector<16x32xf32> -> vector<16x32xf32>
    %c0_20 = arith.constant 0 : index
    %c0_21 = arith.constant 0 : index
    %25 = vector.load %arg9[%c0_20, %c0_21] : memref<1x32xf32, #tpu.memory_space<vmem>>, vector<1x32xf32>
    %26 = vector.broadcast %25 : vector<1x32xf32> to vector<16x32xf32>
    %27 = arith.addf %24, %26 : vector<16x32xf32>
    %cst_22 = arith.constant 0.000000e+00 : f32
    %28 = vector.broadcast %cst_22 : f32 to vector<16x32xf32>
    %29 = arith.maximumf %27, %28 : vector<16x32xf32>
    %30 = arith.truncf %29 : vector<16x32xf32> to vector<16x32xbf16>
    %c0_23 = arith.constant 0 : index
    %c0_24 = arith.constant 0 : index
    %31 = vector.load %arg10[%c0_23, %c0_24] : memref<32x128xbf16, #tpu.memory_space<vmem>>, vector<32x128xbf16>
    %cst_25 = arith.constant dense<0.000000e+00> : vector<16x128xf32>
    %32 = tpu.matmul %30, %31, %cst_25 {dimension_numbers = #tpu.dot_dimension_numbers<[1], [0], [0], [1], [0, 0, 1, 1], [], []>} : vector<16x32xbf16>, vector<32x128xbf16>, vector<16x128xf32> -> vector<16x128xf32>
    %c0_26 = arith.constant 0 : index
    %c0_27 = arith.constant 0 : index
    %33 = vector.load %arg11[%c0_26, %c0_27] : memref<1x128xf32, #tpu.memory_space<vmem>>, vector<1x128xf32>
    %34 = vector.broadcast %33 : vector<1x128xf32> to vector<16x128xf32>
    %35 = arith.addf %32, %34 : vector<16x128xf32>
    %c0_28 = arith.constant 0 : index
    %c0_29 = arith.constant 0 : index
    %36 = vector.load %arg12[%c0_28, %c0_29] : memref<16x128xf32, #tpu.memory_space<vmem>>, vector<16x128xf32>
    tpu.vector_store %arg12[%c0_28, %c0_29], %35 {strides = array<i32>} : memref<16x128xf32, #tpu.memory_space<vmem>>, vector<16x128xf32>,
    return
  }
  func.func @transform_0(%arg0: i32) -> (i32, i32) {
    %c0_i32 = arith.constant 0 : i32
    %c0_i32_0 = arith.constant 0 : i32
    return %arg0, %c0_i32 : i32, i32
  }
  func.func @transform_1(%arg0: i32) -> (i32, i32) {
    %c0_i32 = arith.constant 0 : i32
    %c0_i32_0 = arith.constant 0 : i32
    return %arg0, %c0_i32 : i32, i32
  }
  func.func @transform_2(%arg0: i32) -> (i32, i32) {
    %c0_i32 = arith.constant 0 : i32
    %c0_i32_0 = arith.constant 0 : i32
    %c0_i32_1 = arith.constant 0 : i32
    return %c0_i32, %c0_i32_0 : i32, i32
  }
  func.func @transform_3(%arg0: i32) -> (i32, i32) {
    %c0_i32 = arith.constant 0 : i32
    %c0_i32_0 = arith.constant 0 : i32
    %c0_i32_1 = arith.constant 0 : i32
    return %c0_i32, %c0_i32_0 : i32, i32
  }
  func.func @transform_4(%arg0: i32) -> (i32, i32) {
    %c0_i32 = arith.constant 0 : i32
    %c0_i32_0 = arith.constant 0 : i32
    %c0_i32_1 = arith.constant 0 : i32
    return %c0_i32, %c0_i32_0 : i32, i32
  }
  func.func @transform_5(%arg0: i32) -> (i32, i32) {
    %c0_i32 = arith.constant 0 : i32
    %c0_i32_0 = arith.constant 0 : i32
    %c0_i32_1 = arith.constant 0 : i32
    return %c0_i32, %c0_i32_0 : i32, i32
  }
  func.func @transform_6(%arg0: i32) -> (i32, i32) {
    %c0_i32 = arith.constant 0 : i32
    %c0_i32_0 = arith.constant 0 : i32
    %c0_i32_1 = arith.constant 0 : i32
    return %c0_i32, %c0_i32_0 : i32, i32
  }
  func.func @transform_7(%arg0: i32) -> (i32, i32) {
    %c0_i32 = arith.constant 0 : i32
    %c0_i32_0 = arith.constant 0 : i32
    %c0_i32_1 = arith.constant 0 : i32
    return %c0_i32, %c0_i32_0 : i32, i32
  }
  func.func @transform_8(%arg0: i32) -> (i32, i32) {
    %c0_i32 = arith.constant 0 : i32
    %c0_i32_0 = arith.constant 0 : i32
    %c0_i32_1 = arith.constant 0 : i32
    return %c0_i32, %c0_i32_0 : i32, i32
  }
  func.func @transform_9(%arg0: i32) -> (i32, i32) {
    %c0_i32 = arith.constant 0 : i32
    %c0_i32_0 = arith.constant 0 : i32
    %c0_i32_1 = arith.constant 0 : i32
    return %c0_i32, %c0_i32_0 : i32, i32
  }
  func.func @transform_10(%arg0: i32) -> (i32, i32) {
    %c0_i32 = arith.constant 0 : i32
    %c0_i32_0 = arith.constant 0 : i32
    %c0_i32_1 = arith.constant 0 : i32
    return %c0_i32, %c0_i32_0 : i32, i32
  }
  func.func @transform_11(%arg0: i32) -> (i32, i32) {
    %c0_i32 = arith.constant 0 : i32
    %c0_i32_0 = arith.constant 0 : i32
    return %arg0, %c0_i32 : i32, i32
  }
}

</mosaic_0001>

<llo_original>
// kernel: tpu_custom_call.1
$region0: #{tpu_custom_call.1}
  #allocation0 [shape = 'u32[]', space=smem, size = 0x4, offset = 0x4, fixed_abs, tag = 'smem constant byte address 0x4 - core index']
  #allocation1 [shape = 'u32[72,128]{1,0:T(1,128)}', space=vmem, size = 0x9000, scoped, tag = 'internal scratch']
  %s0 = inlined_call_operand.vmem [shape: f32[64,8], index: 0, kind: input, shape index: {}]
  %s1 = inlined_call_operand.vmem [shape: f32[64,4], index: 1, kind: input, shape index: {}]
  %s2 = inlined_call_operand.vmem [shape: bf16[8,64], index: 2, kind: input, shape index: {}]
  %s3 = inlined_call_operand.vmem [shape: bf16[4,64], index: 3, kind: input, shape index: {}]
  %s4 = inlined_call_operand.vmem [shape: f32[1,64], index: 4, kind: input, shape index: {}]
  %s5 = inlined_call_operand.vmem [shape: bf16[64,128], index: 5, kind: input, shape index: {}]
  %s6 = inlined_call_operand.vmem [shape: f32[1,128], index: 6, kind: input, shape index: {}]
  %s7 = inlined_call_operand.vmem [shape: bf16[128,32], index: 7, kind: input, shape index: {}]
  %s8 = inlined_call_operand.vmem [shape: f32[1,32], index: 8, kind: input, shape index: {}]
  %s9 = inlined_call_operand.vmem [shape: bf16[32,128], index: 9, kind: input, shape index: {}]
  %s10 = inlined_call_operand.vmem [shape: f32[1,128], index: 10, kind: input, shape index: {}]
  %s11 = inlined_call_operand.hbm [shape: f32[64,128], index: 11, kind: output, shape index: {}]
  %s12 = sld [smem:[#allocation0]]
  $region77: #{tpu_custom_call.1} parent=0
    _
  %s14 = ssub.s32 1, %s12
  %s15 = scalar_select 0, %s14, %s12
  $region1: #{tpu_custom_call.1} parent=0
    #allocation2 [shape = 'u8[16384]{0}', space=vmem, size = 0x4000, scoped, tag = 'output window, operand 0']
    #allocation3 [shape = 's32[2]{0}', space=sflag, size = 0x8, scoped, tag = 'scoped memory for tpu_custom_call.1']
    %16 = vsyncpa [#allocation3], 0
    %s17 = scalar_lea.sflag [#allocation3], 1
    %18 = vsyncpa %s17, 0
    loop: start=0, step=1, limit=6
    $region2: #{tpu_custom_call.1} parent=1 // loop_pre_header
      _
    $region3: #{tpu_custom_call.1} parent=1 // loop_header
      %s20 = sphi 0, %s24
      %p21 = scmp.ge.s32.totalorder %s20, 6
      %s30 = sphi 0, %s32
      %s33 = sphi 0, %s30
      %s34 = sphi 0, %s33
      %s50 = sphi 0, %s34
      %s56 = sphi 0, %s58
      %s59 = sphi 0, %s56
      %s60 = sphi 0, %s59
      %s76 = sphi 0, %s60
      %s80 = sphi 0, %s80
      %s82 = sphi 0, %s80
      %s83 = sphi 0, %s82
      %s97 = sphi 0, %s83
      %s101 = sphi 0, %s101
      %s103 = sphi 0, %s101
      %s104 = sphi 0, %s103
      %s118 = sphi 0, %s104
      %s122 = sphi 0, %s122
      %s124 = sphi 0, %s122
      %s125 = sphi 0, %s124
      %s139 = sphi 0, %s125
      %s143 = sphi 0, %s143
      %s145 = sphi 0, %s143
      %s146 = sphi 0, %s145
      %s160 = sphi 0, %s146
      %s164 = sphi 0, %s164
      %s166 = sphi 0, %s164
      %s167 = sphi 0, %s166
      %s181 = sphi 0, %s167
      %s185 = sphi 0, %s185
      %s187 = sphi 0, %s185
      %s188 = sphi 0, %s187
      %s202 = sphi 0, %s188
      %s206 = sphi 0, %s206
      %s208 = sphi 0, %s206
      %s209 = sphi 0, %s208
      %s223 = sphi 0, %s209
      %s227 = sphi 0, %s227
      %s229 = sphi 0, %s227
      %s230 = sphi 0, %s229
      %s244 = sphi 0, %s230
      %s248 = sphi 0, %s248
      %s250 = sphi 0, %s248
      %s251 = sphi 0, %s250
      %s265 = sphi 0, %s251
      %s271 = sphi 0, %s273
      %s274 = sphi 0, %s271
      %s275 = sphi 0, %s274
      %s291 = sphi 0, %s275
    $region4: #{tpu_custom_call.1} parent=1 // loop_header_branch
      %23 = sbr.rel (%p21) target = $region8
    $region5: #{tpu_custom_call.1} parent=1 // loop_body
      %s25 = ssub.s32 %s20, 1
      %s26 = ssub.s32 %s20, 2
      %s27 = sadd.s32 %s20, 1
      %s28 = ssub.s32 %s20, %s27
      %p29 = scmp.eq.s32.totalorder %s28, 0
      %s31 = sadd.s32 %s30, 1
      %s32 = scalar_select %p29, %s30, %s31
      %p35 = pneg %p29
      %p36 = scmp.eq.s32.totalorder %s20, 3
      %p37 = por %p35, %p36
      %p38 = scmp.ne.s32.totalorder %s30, %s33
      %p39 = scmp.eq.s32.totalorder %s20, 0
      %p40 = por %p38, %p39
      %p41 = scmp.ne.s32.totalorder %s30, %s33
      %p42 = scmp.eq.s32.totalorder %s25, 3
      %p43 = por %p41, %p42
      %p44 = scmp.ne.s32.totalorder %s33, %s34
      %p45 = scmp.eq.s32.totalorder %s25, 0
      %p46 = por %p44, %p45
      %p47 = scmp.ne.s32.totalorder %s33, %s34
      %p48 = scmp.eq.s32.totalorder %s26, 3
      %p49 = por %p47, %p48
      %p51 = scmp.ne.s32.totalorder %s34, %s50
      %p52 = scmp.eq.s32.totalorder %s26, 0
      %p53 = por %p51, %p52
      %s54 = ssub.s32 %s20, %s27
      %p55 = scmp.eq.s32.totalorder %s54, 0
      %s57 = sadd.s32 %s56, 1
      %s58 = scalar_select %p55, %s56, %s57
      %p61 = pneg %p55
      %p62 = scmp.eq.s32.totalorder %s20, 3
      %p63 = por %p61, %p62
      %p64 = scmp.ne.s32.totalorder %s56, %s59
      %p65 = scmp.eq.s32.totalorder %s20, 0
      %p66 = por %p64, %p65
      %p67 = scmp.ne.s32.totalorder %s56, %s59
      %p68 = scmp.eq.s32.totalorder %s25, 3
      %p69 = por %p67, %p68
      %p70 = scmp.ne.s32.totalorder %s59, %s60
      %p71 = scmp.eq.s32.totalorder %s25, 0
      %p72 = por %p70, %p71
      %p73 = scmp.ne.s32.totalorder %s59, %s60
      %p74 = scmp.eq.s32.totalorder %s26, 3
      %p75 = por %p73, %p74
      %p77 = scmp.ne.s32.totalorder %s60, %s76
      %p78 = scmp.eq.s32.totalorder %s26, 0
      %p79 = por %p77, %p78
      %s81 = sadd.s32 %s80, 1
      %p84 = scmp.eq.s32.totalorder %s20, 3
      %p85 = scmp.ne.s32.totalorder %s80, %s82
      %p86 = scmp.eq.s32.totalorder %s20, 0
      %p87 = por %p85, %p86
      %p88 = scmp.ne.s32.totalorder %s80, %s82
      %p89 = scmp.eq.s32.totalorder %s25, 3
      %p90 = por %p88, %p89
      %p91 = scmp.ne.s32.totalorder %s82, %s83
      %p92 = scmp.eq.s32.totalorder %s25, 0
      %p93 = por %p91, %p92
      %p94 = scmp.ne.s32.totalorder %s82, %s83
      %p95 = scmp.eq.s32.totalorder %s26, 3
      %p96 = por %p94, %p95
      %p98 = scmp.ne.s32.totalorder %s83, %s97
      %p99 = scmp.eq.s32.totalorder %s26, 0
      %p100 = por %p98, %p99
      %s102 = sadd.s32 %s101, 1
      %p105 = scmp.eq.s32.totalorder %s20, 3
      %p106 = scmp.ne.s32.totalorder %s101, %s103
      %p107 = scmp.eq.s32.totalorder %s20, 0
      %p108 = por %p106, %p107
      %p109 = scmp.ne.s32.totalorder %s101, %s103
      %p110 = scmp.eq.s32.totalorder %s25, 3
      %p111 = por %p109, %p110
      %p112 = scmp.ne.s32.totalorder %s103, %s104
      %p113 = scmp.eq.s32.totalorder %s25, 0
      %p114 = por %p112, %p113
      %p115 = scmp.ne.s32.totalorder %s103, %s104
      %p116 = scmp.eq.s32.totalorder %s26, 3
      %p117 = por %p115, %p116
      %p119 = scmp.ne.s32.totalorder %s104, %s118
      %p120 = scmp.eq.s32.totalorder %s26, 0
      %p121 = por %p119, %p120
      %s123 = sadd.s32 %s122, 1
      %p126 = scmp.eq.s32.totalorder %s20, 3
      %p127 = scmp.ne.s32.totalorder %s122, %s124
      %p128 = scmp.eq.s32.totalorder %s20, 0
      %p129 = por %p127, %p128
      %p130 = scmp.ne.s32.totalorder %s122, %s124
      %p131 = scmp.eq.s32.totalorder %s25, 3
      %p132 = por %p130, %p131
      %p133 = scmp.ne.s32.totalorder %s124, %s125
      %p134 = scmp.eq.s32.totalorder %s25, 0
      %p135 = por %p133, %p134
      %p136 = scmp.ne.s32.totalorder %s124, %s125
      %p137 = scmp.eq.s32.totalorder %s26, 3
      %p138 = por %p136, %p137
      %p140 = scmp.ne.s32.totalorder %s125, %s139
      %p141 = scmp.eq.s32.totalorder %s26, 0
      %p142 = por %p140, %p141
      %s144 = sadd.s32 %s143, 1
      %p147 = scmp.eq.s32.totalorder %s20, 3
      %p148 = scmp.ne.s32.totalorder %s143, %s145
      %p149 = scmp.eq.s32.totalorder %s20, 0
      %p150 = por %p148, %p149
      %p151 = scmp.ne.s32.totalorder %s143, %s145
      %p152 = scmp.eq.s32.totalorder %s25, 3
      %p153 = por %p151, %p152
      %p154 = scmp.ne.s32.totalorder %s145, %s146
      %p155 = scmp.eq.s32.totalorder %s25, 0
      %p156 = por %p154, %p155
      %p157 = scmp.ne.s32.totalorder %s145, %s146
      %p158 = scmp.eq.s32.totalorder %s26, 3
      %p159 = por %p157, %p158
      %p161 = scmp.ne.s32.totalorder %s146, %s160
      %p162 = scmp.eq.s32.totalorder %s26, 0
      %p163 = por %p161, %p162
      %s165 = sadd.s32 %s164, 1
      %p168 = scmp.eq.s32.totalorder %s20, 3
      %p169 = scmp.ne.s32.totalorder %s164, %s166
      %p170 = scmp.eq.s32.totalorder %s20, 0
      %p171 = por %p169, %p170
      %p172 = scmp.ne.s32.totalorder %s164, %s166
      %p173 = scmp.eq.s32.totalorder %s25, 3
      %p174 = por %p172, %p173
      %p175 = scmp.ne.s32.totalorder %s166, %s167
      %p176 = scmp.eq.s32.totalorder %s25, 0
      %p177 = por %p175, %p176
      %p178 = scmp.ne.s32.totalorder %s166, %s167
      %p179 = scmp.eq.s32.totalorder %s26, 3
      %p180 = por %p178, %p179
      %p182 = scmp.ne.s32.totalorder %s167, %s181
      %p183 = scmp.eq.s32.totalorder %s26, 0
      %p184 = por %p182, %p183
      %s186 = sadd.s32 %s185, 1
      %p189 = scmp.eq.s32.totalorder %s20, 3
      %p190 = scmp.ne.s32.totalorder %s185, %s187
      %p191 = scmp.eq.s32.totalorder %s20, 0
      %p192 = por %p190, %p191
      %p193 = scmp.ne.s32.totalorder %s185, %s187
      %p194 = scmp.eq.s32.totalorder %s25, 3
      %p195 = por %p193, %p194
      %p196 = scmp.ne.s32.totalorder %s187, %s188
      %p197 = scmp.eq.s32.totalorder %s25, 0
      %p198 = por %p196, %p197
      %p199 = scmp.ne.s32.totalorder %s187, %s188
      %p200 = scmp.eq.s32.totalorder %s26, 3
      %p201 = por %p199, %p200
      %p203 = scmp.ne.s32.totalorder %s188, %s202
      %p204 = scmp.eq.s32.totalorder %s26, 0
      %p205 = por %p203, %p204
      %s207 = sadd.s32 %s206, 1
      %p210 = scmp.eq.s32.totalorder %s20, 3
      %p211 = scmp.ne.s32.totalorder %s206, %s208
      %p212 = scmp.eq.s32.totalorder %s20, 0
      %p213 = por %p211, %p212
      %p214 = scmp.ne.s32.totalorder %s206, %s208
      %p215 = scmp.eq.s32.totalorder %s25, 3
      %p216 = por %p214, %p215
      %p217 = scmp.ne.s32.totalorder %s208, %s209
      %p218 = scmp.eq.s32.totalorder %s25, 0
      %p219 = por %p217, %p218
      %p220 = scmp.ne.s32.totalorder %s208, %s209
      %p221 = scmp.eq.s32.totalorder %s26, 3
      %p222 = por %p220, %p221
      %p224 = scmp.ne.s32.totalorder %s209, %s223
      %p225 = scmp.eq.s32.totalorder %s26, 0
      %p226 = por %p224, %p225
      %s228 = sadd.s32 %s227, 1
      %p231 = scmp.eq.s32.totalorder %s20, 3
      %p232 = scmp.ne.s32.totalorder %s227, %s229
      %p233 = scmp.eq.s32.totalorder %s20, 0
      %p234 = por %p232, %p233
      %p235 = scmp.ne.s32.totalorder %s227, %s229
      %p236 = scmp.eq.s32.totalorder %s25, 3
      %p237 = por %p235, %p236
      %p238 = scmp.ne.s32.totalorder %s229, %s230
      %p239 = scmp.eq.s32.totalorder %s25, 0
      %p240 = por %p238, %p239
      %p241 = scmp.ne.s32.totalorder %s229, %s230
      %p242 = scmp.eq.s32.totalorder %s26, 3
      %p243 = por %p241, %p242
      %p245 = scmp.ne.s32.totalorder %s230, %s244
      %p246 = scmp.eq.s32.totalorder %s26, 0
      %p247 = por %p245, %p246
      %s249 = sadd.s32 %s248, 1
      %p252 = scmp.eq.s32.totalorder %s20, 3
      %p253 = scmp.ne.s32.totalorder %s248, %s250
      %p254 = scmp.eq.s32.totalorder %s20, 0
      %p255 = por %p253, %p254
      %p256 = scmp.ne.s32.totalorder %s248, %s250
      %p257 = scmp.eq.s32.totalorder %s25, 3
      %p258 = por %p256, %p257
      %p259 = scmp.ne.s32.totalorder %s250, %s251
      %p260 = scmp.eq.s32.totalorder %s25, 0
      %p261 = por %p259, %p260
      %p262 = scmp.ne.s32.totalorder %s250, %s251
      %p263 = scmp.eq.s32.totalorder %s26, 3
      %p264 = por %p262, %p263
      %p266 = scmp.ne.s32.totalorder %s251, %s265
      %p267 = scmp.eq.s32.totalorder %s26, 0
      %p268 = por %p266, %p267
      %s269 = ssub.s32 %s20, %s27
      %p270 = scmp.eq.s32.totalorder %s269, 0
      %s272 = sadd.s32 %s271, 1
      %s273 = scalar_select %p270, %s271, %s272
      %p276 = pneg %p270
      %p277 = scmp.eq.s32.totalorder %s20, 3
      %p278 = por %p276, %p277
      %p279 = scmp.ne.s32.totalorder %s271, %s274
      %p280 = scmp.eq.s32.totalorder %s20, 0
      %p281 = por %p279, %p280
      %p282 = scmp.ne.s32.totalorder %s271, %s274
      %p283 = scmp.eq.s32.totalorder %s25, 3
      %p284 = por %p282, %p283
      %p285 = scmp.ne.s32.totalorder %s274, %s275
      %p286 = scmp.eq.s32.totalorder %s25, 0
      %p287 = por %p285, %p286
      %p288 = scmp.ne.s32.totalorder %s274, %s275
      %p289 = scmp.eq.s32.totalorder %s26, 3
      %p290 = por %p288, %p289
      %p292 = scmp.ne.s32.totalorder %s275, %s291
      %p293 = scmp.eq.s32.totalorder %s26, 0
      %p294 = por %p292, %p293
      %p295 = scmp.le.s32.totalorder 1, %s20
      %p296 = scmp.lt.s32.totalorder %s20, 5
      %p297 = pnand %p295, %p296
      %p298 = pneg %p297
      // Predicated region
      $region9: #{tpu_custom_call.1} parent=5 // pred_check
        _
      $region10: #{tpu_custom_call.1} parent=5 // pred_check_branch
        %300 = sbr.rel (%p297) target = $region12
      $region11: #{tpu_custom_call.1} parent=5 // pred_region
        %s301 = ssub.s32 %s20, 1
        // Predicated region
        $region13: #{tpu_custom_call.1} parent=11 // pred_check
          %p302 = pneg %p93
        $region14: #{tpu_custom_call.1} parent=11 // pred_check_branch
          %304 = sbr.rel (%p302) target = $region16
        $region15: #{tpu_custom_call.1} parent=11 // pred_region
          _
        $region16: #{tpu_custom_call.1} parent=11 // pred_fallthru
          _
        // Predicated region
        $region17: #{tpu_custom_call.1} parent=11 // pred_check
          %p305 = pneg %p114
        $region18: #{tpu_custom_call.1} parent=11 // pred_check_branch
          %307 = sbr.rel (%p305) target = $region20
        $region19: #{tpu_custom_call.1} parent=11 // pred_region
          _
        $region20: #{tpu_custom_call.1} parent=11 // pred_fallthru
          _
        // Predicated region
        $region21: #{tpu_custom_call.1} parent=11 // pred_check
          %p308 = pneg %p135
        $region22: #{tpu_custom_call.1} parent=11 // pred_check_branch
          %310 = sbr.rel (%p308) target = $region24
        $region23: #{tpu_custom_call.1} parent=11 // pred_region
          _
        $region24: #{tpu_custom_call.1} parent=11 // pred_fallthru
          _
        // Predicated region
        $region25: #{tpu_custom_call.1} parent=11 // pred_check
          %p311 = pneg %p156
        $region26: #{tpu_custom_call.1} parent=11 // pred_check_branch
          %313 = sbr.rel (%p311) target = $region28
        $region27: #{tpu_custom_call.1} parent=11 // pred_region
          _
        $region28: #{tpu_custom_call.1} parent=11 // pred_fallthru
          _
        // Predicated region
        $region29: #{tpu_custom_call.1} parent=11 // pred_check
          %p314 = pneg %p177
        $region30: #{tpu_custom_call.1} parent=11 // pred_check_branch
          %316 = sbr.rel (%p314) target = $region32
        $region31: #{tpu_custom_call.1} parent=11 // pred_region
          _
        $region32: #{tpu_custom_call.1} parent=11 // pred_fallthru
          _
        // Predicated region
        $region33: #{tpu_custom_call.1} parent=11 // pred_check
          %p317 = pneg %p198
        $region34: #{tpu_custom_call.1} parent=11 // pred_check_branch
          %319 = sbr.rel (%p317) target = $region36
        $region35: #{tpu_custom_call.1} parent=11 // pred_region
          _
        $region36: #{tpu_custom_call.1} parent=11 // pred_fallthru
          _
        // Predicated region
        $region37: #{tpu_custom_call.1} parent=11 // pred_check
          %p320 = pneg %p219
        $region38: #{tpu_custom_call.1} parent=11 // pred_check_branch
          %322 = sbr.rel (%p320) target = $region40
        $region39: #{tpu_custom_call.1} parent=11 // pred_region
          _
        $region40: #{tpu_custom_call.1} parent=11 // pred_fallthru
          _
        // Predicated region
        $region41: #{tpu_custom_call.1} parent=11 // pred_check
          %p323 = pneg %p240
        $region42: #{tpu_custom_call.1} parent=11 // pred_check_branch
          %325 = sbr.rel (%p323) target = $region44
        $region43: #{tpu_custom_call.1} parent=11 // pred_region
          _
        $region44: #{tpu_custom_call.1} parent=11 // pred_fallthru
          _
        // Predicated region
        $region45: #{tpu_custom_call.1} parent=11 // pred_check
          %p326 = pneg %p261
        $region46: #{tpu_custom_call.1} parent=11 // pred_check_branch
          %328 = sbr.rel (%p326) target = $region48
        $region47: #{tpu_custom_call.1} parent=11 // pred_region
          _
        $region48: #{tpu_custom_call.1} parent=11 // pred_fallthru
          _
      $region12: #{tpu_custom_call.1} parent=5 // pred_fallthru
        _
      %p329 = scmp.lt.s32.totalorder %s20, 4
      // Predicated region
      $region49: #{tpu_custom_call.1} parent=5 // pred_check
        %p330 = pneg %p329
      $region50: #{tpu_custom_call.1} parent=5 // pred_check_branch
        %332 = sbr.rel (%p330) target = $region52
      $region51: #{tpu_custom_call.1} parent=5 // pred_region
        // Predicated region
        $region53: #{tpu_custom_call.1} parent=51 // pred_check
          %p333 = pneg %p40
        $region54: #{tpu_custom_call.1} parent=51 // pred_check_branch
          %335 = sbr.rel (%p333) target = $region56
        $region55: #{tpu_custom_call.1} parent=51 // pred_region
          %s336 = smul.u32 2, %s20
          %p337 = scmp.lt.s32.totalorder %s336, 7
          %s338 = scalar_select %p337, %s336, 7
          %s339 = smul.addr %s338, 8
          %s340 = scalar_lea.vmem %s0, %s339
          %s341 = smul.u32 2, %s20
        $region56: #{tpu_custom_call.1} parent=51 // pred_fallthru
          _
        // Predicated region
        $region57: #{tpu_custom_call.1} parent=51 // pred_check
          %p342 = pneg %p66
        $region58: #{tpu_custom_call.1} parent=51 // pred_check_branch
          %344 = sbr.rel (%p342) target = $region60
        $region59: #{tpu_custom_call.1} parent=51 // pred_region
          %s345 = smul.u32 2, %s20
          %p346 = scmp.lt.s32.totalorder %s345, 7
          %s347 = scalar_select %p346, %s345, 7
          %s348 = smul.addr %s347, 8
          %s349 = scalar_lea.vmem %s1, %s348
          %s350 = smul.u32 2, %s20
        $region60: #{tpu_custom_call.1} parent=51 // pred_fallthru
          _
      $region52: #{tpu_custom_call.1} parent=5 // pred_fallthru
        _
      %p351 = scmp.le.s32.totalorder 1, %s20
      %p352 = scmp.lt.s32.totalorder %s20, 5
      %p353 = pnand %p351, %p352
      %p354 = pneg %p353
      // Predicated region
      $region61: #{tpu_custom_call.1} parent=5 // pred_check
        _
      $region62: #{tpu_custom_call.1} parent=5 // pred_check_branch
        %356 = sbr.rel (%p353) target = $region64
      $region63: #{tpu_custom_call.1} parent=5 // pred_region
        %s357 = ssub.s32 %s20, 1
        %s358 = smul.u32 2, %s25
        %p359 = scmp.lt.s32.totalorder %s358, 7
        %s360 = scalar_select %p359, %s358, 7
        %s361 = smul.addr %s360, 8
        %s362 = scalar_lea.vmem %s0, %s361
        %p363 = pneg %p46
        %p364 = pneg %p43
        %s365 = smul.u32 2, %s25
        %p366 = scmp.lt.s32.totalorder %s365, 7
        %s367 = scalar_select %p366, %s365, 7
        %s368 = smul.addr %s367, 8
        %s369 = scalar_lea.vmem %s1, %s368
        %p370 = pneg %p72
        %p371 = pneg %p69
        %p372 = pneg %p93
        %p373 = pneg %p90
        %p374 = pneg %p114
        %p375 = pneg %p111
        %p376 = pneg %p135
        %p377 = pneg %p132
        %p378 = pneg %p156
        %p379 = pneg %p153
        %p380 = pneg %p177
        %p381 = pneg %p174
        %p382 = pneg %p198
        %p383 = pneg %p195
        %p384 = pneg %p219
        %p385 = pneg %p216
        %p386 = pneg %p240
        %p387 = pneg %p237
        %p388 = pneg %p261
        %p389 = pneg %p258
        %p390 = pneg %p287
        %p391 = pneg %p284
        %s392 = sand.u32 %s274, 1
        %s393 = scalar_lea.sflag [#allocation3], %s392
        %s394 = sand.u32 %s274, 1
        %s395 = smul.addr %s394, 16
        %s396 = scalar_lea.vmem [#allocation2], %s395
        %s397 = smul.u32 2, %s25
        %p398 = scmp.lt.s32.totalorder %s397, 7
        %s399 = scalar_select %p398, %s397, 7
        %s400 = smul.addr %s399, 8
        %s401 = scalar_lea.vmem %s0, %s400
        %s402 = smul.u32 2, %s25
        %s403 = smul.u32 2, %s25
        %p404 = scmp.lt.s32.totalorder %s403, 7
        %s405 = scalar_select %p404, %s403, 7
        %s406 = smul.addr %s405, 8
        %s407 = scalar_lea.vmem %s1, %s406
        %s408 = smul.u32 2, %s25
        %s409 = smul.u32 2, %s25
        %v411 = vld [vmem:[%s401] sm:$0xff]
        %v412 = vld [vmem:[%s401 + $0x8] sm:$0xff]
        %v413 = vpack.c.bf16 %v412, %v411
        %v414 = vld [vmem:[%s2] sm:$0xf]
        %v415 = vld [vmem:[%s407] sm:$0xff]
        %v416 = vld [vmem:[%s407 + $0x8] sm:$0xff]
        %v417 = vpack.c.bf16 %v416, %v415
        %v418 = vld [vmem:[%s3] sm:$0x3]
        %vm419 = vcmask 31744
        %v421 = vsel %vm419, %v417, 0
        %vm423 = vcmask 1041408
        %v425 = vsel %vm423, %v418, 0
        %427 = vmatpush.bf16.msra.mxu0 0
        %428 = vmatpush.bf16.msra.mxu0 0
        %429 = vmatpush.bf16.msra.mxu0 0
        %430 = vmatpush.bf16.msra.mxu0 0
        %431 = vmatpush.bf16.msra.mxu0 0
        %432 = vmatpush.bf16.msra.mxu0 0
        %433 = vmatpush.bf16.msra.mxu0 0
        %434 = vmatpush.bf16.msra.mxu0 %v425
        %435 = vmatmul.bf16.gmra.mxu0 %v421
        %v436 = vpop.f32.mrf.mxu0
        %v437 = vadd.f32 0.0, %v436
        %v438 = vpop.f32.mrf.mxu0
        %v439 = vadd.f32 0.0, %v438
        %440 = vdwg.mxu0
        %vm441 = vcmask 64512
        %v443 = vsel %vm441, %v413, 0
        %vm445 = vcmask 1043456
        %v447 = vsel %vm445, %v414, 0
        %449 = vmatpush.bf16.msra.mxu0 0
        %450 = vmatpush.bf16.msra.mxu0 0
        %451 = vmatpush.bf16.msra.mxu0 0
        %452 = vmatpush.bf16.msra.mxu0 0
        %453 = vmatpush.bf16.msra.mxu0 0
        %454 = vmatpush.bf16.msra.mxu0 0
        %455 = vmatpush.bf16.msra.mxu0 0
        %456 = vmatpush.bf16.msra.mxu0 %v447
        %457 = vmatmul.bf16.gmra.mxu0 %v443
        %v458 = vpop.f32.mrf.mxu0
        %v459 = vadd.f32 %v437, %v458
        %v460 = vpop.f32.mrf.mxu0
        %v461 = vadd.f32 %v439, %v460
        %462 = vdwg.mxu0
        %v463 = vld [vmem:[%s4] sm:$0x1]
        %v465 = vperm.slane %v463, 0
        %v467 = vadd.f32 %v459, %v465
        %v468 = vadd.f32 %v461, %v465
        %v469 = vmax.f32 %v467, 0.0
        %v470 = vmax.f32 %v468, 0.0
        %v471 = vpack.c.bf16 %v470, %v469
        %v472 = vld [vmem:[%s5] sm:$0xf]
        %v473 = vld [vmem:[%s5 + $0x4] sm:$0xf]
        %v474 = vld [vmem:[%s5 + $0x8] sm:$0xf]
        %v475 = vld [vmem:[%s5 + $0xc] sm:$0xf]
        %v476 = vld [vmem:[%s5 + $0x10] sm:$0xf]
        %v477 = vld [vmem:[%s5 + $0x14] sm:$0xf]
        %v478 = vld [vmem:[%s5 + $0x18] sm:$0xf]
        %v479 = vld [vmem:[%s5 + $0x1c] sm:$0xf]
        %v480 = vld [vmem:[%s6] sm:$0x1]
        %v482 = vperm.slane %v480, 0
        %v492 = vunpack.c.l.b16 %v472
        %v493 = vunpack.c.l.b16 %v473
        %v494 = vunpack.c.l.b16 %v474
        %v495 = vunpack.c.l.b16 %v475
        %v496 = vunpack.c.l.b16 %v476
        %v497 = vunpack.c.l.b16 %v477
        %v498 = vunpack.c.l.b16 %v478
        %v499 = vunpack.c.l.b16 %v479
        %v500 = vpack.c.b16 %v493, %v492
        %v501 = vpack.c.b16 %v495, %v494
        %v502 = vpack.c.b16 %v497, %v496
        %v503 = vpack.c.b16 %v499, %v498
        %vm508 = vcmask 523264
        %v510 = vsel %vm508, %v471, 0
        %512 = vmatpush.bf16.msra.mxu0 0
        %513 = vmatpush.bf16.msra.mxu0 0
        %514 = vmatpush.bf16.msra.mxu0 0
        %515 = vmatpush.bf16.msra.mxu0 0
        %516 = vmatpush.bf16.msra.mxu0 %v503
        %517 = vmatpush.bf16.msra.mxu0 %v502
        %518 = vmatpush.bf16.msra.mxu0 %v501
        %519 = vmatpush.bf16.msra.mxu0 %v500
        %520 = vmatmul.bf16.gmra.mxu0 %v510
        %v521 = vpop.f32.mrf.mxu0
        %v522 = vadd.f32 %v482, %v521
        %v523 = vpop.f32.mrf.mxu0
        %v524 = vadd.f32 %v482, %v523
        %525 = vdwg.mxu0
        %v526 = vmax.f32 %v522, 0.0
        %v527 = vmax.f32 %v524, 0.0
        %v528 = vpack.c.bf16 %v527, %v526
        %v529 = vld [vmem:[%s7] sm:$0xf]
        %v530 = vld [vmem:[%s7 + $0x4] sm:$0xf]
        %v531 = vld [vmem:[%s7 + $0x8] sm:$0xf]
        %v532 = vld [vmem:[%s7 + $0xc] sm:$0xf]
        %v533 = vld [vmem:[%s7 + $0x10] sm:$0xf]
        %v534 = vld [vmem:[%s7 + $0x14] sm:$0xf]
        %v535 = vld [vmem:[%s7 + $0x18] sm:$0xf]
        %v536 = vld [vmem:[%s7 + $0x1c] sm:$0xf]
        %v537 = vld [vmem:[%s7 + $0x20] sm:$0xf]
        %v538 = vld [vmem:[%s7 + $0x24] sm:$0xf]
        %v539 = vld [vmem:[%s7 + $0x28] sm:$0xf]
        %v540 = vld [vmem:[%s7 + $0x2c] sm:$0xf]
        %v541 = vld [vmem:[%s7 + $0x30] sm:$0xf]
        %v542 = vld [vmem:[%s7 + $0x34] sm:$0xf]
        %v543 = vld [vmem:[%s7 + $0x38] sm:$0xf]
        %v544 = vld [vmem:[%s7 + $0x3c] sm:$0xf]
        %v545 = vld [vmem:[%s8] sm:$0x1]
        %v547 = vperm.slane %v545, 0
        %v565 = vunpack.c.l.b16 %v529
        %v566 = vunpack.c.l.b16 %v530
        %v567 = vunpack.c.l.b16 %v531
        %v568 = vunpack.c.l.b16 %v532
        %v569 = vunpack.c.l.b16 %v533
        %v570 = vunpack.c.l.b16 %v534
        %v571 = vunpack.c.l.b16 %v535
        %v572 = vunpack.c.l.b16 %v536
        %v573 = vunpack.c.l.b16 %v537
        %v574 = vunpack.c.l.b16 %v538
        %v575 = vunpack.c.l.b16 %v539
        %v576 = vunpack.c.l.b16 %v540
        %v577 = vunpack.c.l.b16 %v541
        %v578 = vunpack.c.l.b16 %v542
        %v579 = vunpack.c.l.b16 %v543
        %v580 = vunpack.c.l.b16 %v544
        %v581 = vpack.c.b16 %v566, %v565
        %v582 = vpack.c.b16 %v568, %v567
        %v583 = vpack.c.b16 %v570, %v569
        %v584 = vpack.c.b16 %v572, %v571
        %v585 = vpack.c.b16 %v574, %v573
        %v586 = vpack.c.b16 %v576, %v575
        %v587 = vpack.c.b16 %v578, %v577
        %v588 = vpack.c.b16 %v580, %v579
        %597 = vmatpush.bf16.msra.mxu0 %v588
        %598 = vmatpush.bf16.msra.mxu0 %v587
        %599 = vmatpush.bf16.msra.mxu0 %v586
        %600 = vmatpush.bf16.msra.mxu0 %v585
        %601 = vmatpush.bf16.msra.mxu0 %v584
        %602 = vmatpush.bf16.msra.mxu0 %v583
        %603 = vmatpush.bf16.msra.mxu0 %v582
        %604 = vmatpush.bf16.msra.mxu0 %v581
        %605 = vmatmul.bf16.gmra.mxu0 %v528
        %v606 = vpop.f32.mrf.mxu0
        %v607 = vadd.f32 %v547, %v606
        %v608 = vpop.f32.mrf.mxu0
        %v609 = vadd.f32 %v547, %v608
        %610 = vdwg.mxu0
        %v611 = vmax.f32 %v607, 0.0
        %v612 = vmax.f32 %v609, 0.0
        %v613 = vpack.c.bf16 %v612, %v611
        %v614 = vld [vmem:[%s9] sm:$0xf]
        %v615 = vld [vmem:[%s9 + $0x4] sm:$0xf]
        %v616 = vld [vmem:[%s9 + $0x8] sm:$0xf]
        %v617 = vld [vmem:[%s9 + $0xc] sm:$0xf]
        %v618 = vld [vmem:[%s10] sm:$0x1]
        %v620 = vperm.slane %v618, 0
        %v626 = vunpack.c.l.b16 %v614
        %v627 = vunpack.c.l.b16 %v615
        %v628 = vunpack.c.l.b16 %v616
        %v629 = vunpack.c.l.b16 %v617
        %v630 = vpack.c.b16 %v627, %v626
        %v631 = vpack.c.b16 %v629, %v628
        %vm634 = vcmask 261120
        %v636 = vsel %vm634, %v613, 0
        %638 = vmatpush.bf16.msra.mxu0 0
        %639 = vmatpush.bf16.msra.mxu0 0
        %640 = vmatpush.bf16.msra.mxu0 0
        %641 = vmatpush.bf16.msra.mxu0 0
        %642 = vmatpush.bf16.msra.mxu0 0
        %643 = vmatpush.bf16.msra.mxu0 0
        %644 = vmatpush.bf16.msra.mxu0 %v631
        %645 = vmatpush.bf16.msra.mxu0 %v630
        %646 = vmatmul.bf16.gmra.mxu0 %v636
        %v647 = vpop.f32.mrf.mxu0
        %v648 = vadd.f32 %v620, %v647
        %v649 = vpop.f32.mrf.mxu0
        %v650 = vadd.f32 %v620, %v649
        %651 = vdwg.mxu0
        %652 = vst [vmem:[%s396] sm:$0xff] %v648
        %653 = vst [vmem:[%s396 + $0x8] sm:$0xff] %v650
        %s654 = sand.u32 %s274, 1
        %s655 = scalar_lea.sflag [#allocation3], %s654
        %s656 = sand.u32 %s274, 1
        %s657 = smul.addr %s656, 16
        %s658 = scalar_lea.vmem [#allocation2], %s657
        // Predicated region
        $region65: #{tpu_custom_call.1} parent=63 // pred_check
          %p659 = pneg %p284
        $region66: #{tpu_custom_call.1} parent=63 // pred_check_branch
          %661 = sbr.rel (%p659) target = $region68
        $region67: #{tpu_custom_call.1} parent=63 // pred_region
          %s662 = smul.u32 2, %s25
          %664 = vsyncadd %s655, 0
          %s665 = smul.addr %s662, 8
          %s666 = scalar_lea.hbm %s11, %s665
          %s667 = sshll.u32 %s658, 4
          %s668 = int_to_ptr.vmem [resolvable:$true] %s667
          %s669 = sshll.u32 %s666, 4
          %s670 = int_to_ptr.hbm [resolvable:$true] %s669
          %675 = dma.vmem_to_hbm [thread:$0]  %s668, 256, %s670, %s655, 128, 128, 8
        $region68: #{tpu_custom_call.1} parent=63 // pred_fallthru
          _
      $region64: #{tpu_custom_call.1} parent=5 // pred_fallthru
        _
      %p676 = scmp.le.s32.totalorder 2, %s20
      // Predicated region
      $region69: #{tpu_custom_call.1} parent=5 // pred_check
        %p677 = pneg %p676
      $region70: #{tpu_custom_call.1} parent=5 // pred_check_branch
        %679 = sbr.rel (%p677) target = $region72
      $region71: #{tpu_custom_call.1} parent=5 // pred_region
        %s680 = ssub.s32 %s20, 2
        // Predicated region
        $region73: #{tpu_custom_call.1} parent=71 // pred_check
          %p681 = pneg %p290
        $region74: #{tpu_custom_call.1} parent=71 // pred_check_branch
          %683 = sbr.rel (%p681) target = $region76
        $region75: #{tpu_custom_call.1} parent=71 // pred_region
          %s684 = sand.u32 %s275, 1
          %s685 = scalar_lea.sflag [#allocation3], %s684
          %s686 = sand.u32 %s275, 1
          %s687 = smul.addr %s686, 16
          %s688 = scalar_lea.vmem [#allocation2], %s687
          %690 = dma.done %s685, 256
        $region76: #{tpu_custom_call.1} parent=71 // pred_fallthru
          _
      $region72: #{tpu_custom_call.1} parent=5 // pred_fallthru
        _
    $region6: #{tpu_custom_call.1} parent=1 // loop_footer
      %s24 = sadd.s32 1, %s20
    $region7: #{tpu_custom_call.1} parent=1 // loop_footer_branch
      %19 = sbr.rel target = $region3
    $region8: #{tpu_custom_call.1} parent=1 // loop_exit
      _
    %691 = vsyncpa [#allocation3], 1
    %s692 = scalar_lea.sflag [#allocation3], 1
    %693 = vsyncpa %s692, 1

</llo_original>
